<compile_context>
chip_gen: v7x
topology: tpu7x:2x2x1
jax: 0.10.0
libtpu: 0.0.40
codegen_flags: <defaults>
</compile_context>

<pallas_src>
import jax
import jax.numpy as jnp
from jax.experimental import pallas as pl
from jax.experimental.pallas import tpu as pltpu


# ---------------------------------------------------------------------------
# Fused kernel: one grid step == one bag (one batch element).
#   x_ref    : (BAG, C*HW)   input bag, spatial+channel flattened onto lanes
#   w1b_ref  : (C*HW, D)     GAP folded into the feature projection
#   b1_ref   : (1, D)
#   v_ref    : (D, K), u_ref : (1, K)     attention scoring
#   wp_ref   : (D, E), bp_ref: (1, E)     aggregator projection
#   wfc_ref  : (E, OUT), bfc_ref: (1, OUT) final fc
#   out_ref  : (1, OUT)
#   attn_ref : (BAG, 1)
# ---------------------------------------------------------------------------
def aggregation_kernel(x_ref, w1b_ref, b1_ref, v_ref, u_ref,
                       wp_ref, bp_ref, wfc_ref, bfc_ref,
                       out_ref, attn_ref):
    bag = x_ref.shape[0]
    x = x_ref[...].astype(jnp.float32)                               # (BAG, C*HW)

    # "resnet.forward_extract" stand-in: GAP folded into one MXU matmul (K = C*HW).
    f = jnp.dot(x, w1b_ref[...],
                preferred_element_type=jnp.float32) + b1_ref[...]    # (BAG, D)

    # Gated-attention scores over the bag (flat 2-D matmul, no batched einsum).
    h = jnp.tanh(jnp.dot(f, v_ref[...],
                         preferred_element_type=jnp.float32))        # (BAG, K)
    scores = jnp.sum(h * u_ref[...], axis=-1, keepdims=True)         # (BAG, 1)

    # Softmax over the bag (max-subtracted).
    s_max = jnp.max(scores, axis=0, keepdims=True)
    e = jnp.exp(scores - s_max)
    attn = e / jnp.sum(e, axis=0, keepdims=True)                     # (BAG, 1)

    # Bag-mean folded through the linear projection:
    #   mean_n[(attn_n * f_n) @ Wp + bp] == (mean_n attn_n * f_n) @ Wp + bp
    wmean = jnp.sum(attn * f, axis=0, keepdims=True) * (1.0 / bag)   # (1, D)
    agg = jnp.dot(wmean, wp_ref[...],
                  preferred_element_type=jnp.float32) + bp_ref[...]  # (1, E)

    # Final fc.
    out = jnp.dot(agg, wfc_ref[...],
                  preferred_element_type=jnp.float32) + bfc_ref[...]  # (1, OUT)

    out_ref[...] = out
    attn_ref[...] = attn


# ---------------------------------------------------------------------------
# Wrapper: reshape plumbing + GAP fold + pallas_call with a parallel grid over B.
# ---------------------------------------------------------------------------
def aggregation_forward(x, params):
    B, BAG, C, H, W = x.shape
    HW = H * W
    CHW = C * HW
    D = params['w1'].shape[1]
    K = params['v'].shape[1]
    E = params['wp'].shape[1]
    OUT = params['wfc'].shape[1]

    # Keep the input in its source dtype through the DMA; cast happens in-kernel.
    x3 = x.reshape(B, BAG, CHW)

    # Fold the global-average-pool into the feature matmul (built once, outside).
    w1_big = jnp.repeat(params['w1'], HW, axis=0) * (1.0 / HW)       # (CHW, D)

    def fullspec(shape):
        return pl.BlockSpec(shape, lambda b, _s=shape: (0,) * len(_s))

    out3, attn3 = pl.pallas_call(
        aggregation_kernel,
        out_shape=(jax.ShapeDtypeStruct((B, 1, OUT), jnp.float32),
                   jax.ShapeDtypeStruct((B, BAG, 1), jnp.float32)),
        grid=(B,),
        in_specs=[
            pl.BlockSpec((None, BAG, CHW), lambda b: (b, 0, 0)),     # one bag / step
            fullspec((CHW, D)),                                      # w1_big (resident)
            fullspec((1, D)),                                        # b1
            fullspec((D, K)),                                        # v
            fullspec((1, K)),                                        # u
            fullspec((D, E)),                                        # wp
            fullspec((1, E)),                                        # bp
            fullspec((E, OUT)),                                      # wfc
            fullspec((1, OUT)),                                      # bfc
        ],
        out_specs=(pl.BlockSpec((None, 1, OUT), lambda b: (b, 0, 0)),
                   pl.BlockSpec((None, BAG, 1), lambda b: (b, 0, 0))),
        compiler_params=pltpu.CompilerParams(
            dimension_semantics=("parallel",)),
    )(x3, w1_big, params['b1'], params['v'], params['u'],
      params['wp'], params['bp'], params['wfc'], params['bfc'])

    out = out3[:, 0, :]          # (B, OUT)
    attn = attn3[:, :, 0]        # (B, BAG)
    return out, attn


# ---------------------------------------------------------------------------
# Pure-JAX reference (original, un-folded math) for the correctness check.
# ---------------------------------------------------------------------------
def reference_forward(x, params):
    B, BAG, C, H, W = x.shape
    x3 = x.reshape(B * BAG, C, H * W).astype(jnp.float32)
    gap = jnp.mean(x3, axis=-1)
    feats = gap @ params['w1'] + params['b1']
    feats = feats.reshape(B, BAG, -1)

    h = jnp.tanh(jnp.einsum('bnd,dk->bnk', feats, params['v']))
    scores = jnp.sum(h * params['u'], axis=-1)
    attn = jax.nn.softmax(scores, axis=-1)
    proj = jnp.einsum('bnd,de->bne', attn[:, :, None] * feats, params['wp']) + params['bp']
    agg = jnp.mean(proj, axis=1)
    out = agg @ params['wfc'] + params['bfc']
    return out, attn


if __name__ == "__main__":
    # Small shapes consistent with the module's forward:
    #   x: (batch=2, bag=4, c=4, h=16, w=16), resnet_dim=32, aggregator_dim=16, out=1
    B, BAG, C, H, W = 2, 4, 4, 16, 16
    RESNET_DIM, ATTN_HIDDEN, AGG_DIM, OUT = 32, 16, 16, 1

    key = jax.random.PRNGKey(0)
    kx, k1, k2, k3, k4, k5, k6, k7, k8 = jax.random.split(key, 9)

    x = jax.random.normal(kx, (B, BAG, C, H, W), dtype=jnp.float32)

    params = {
        'w1':  0.1 * jax.random.normal(k1, (C, RESNET_DIM), dtype=jnp.float32),
        'b1':  0.1 * jax.random.normal(k2, (1, RESNET_DIM), dtype=jnp.float32),
        'v':   0.1 * jax.random.normal(k3, (RESNET_DIM, ATTN_HIDDEN), dtype=jnp.float32),
        'u':   0.1 * jax.random.normal(k4, (1, ATTN_HIDDEN), dtype=jnp.float32),
        'wp':  0.1 * jax.random.normal(k5, (RESNET_DIM, AGG_DIM), dtype=jnp.float32),
        'bp':  0.1 * jax.random.normal(k6, (1, AGG_DIM), dtype=jnp.float32),
        'wfc': 0.1 * jax.random.normal(k7, (AGG_DIM, OUT), dtype=jnp.float32),
        'bfc': 0.1 * jax.random.normal(k8, (1, OUT), dtype=jnp.float32),
    }

    out, attn = aggregation_forward(x, params)
    out = jax.block_until_ready(out)
    attn = jax.block_until_ready(attn)

    ref_out, ref_attn = reference_forward(x, params)
    assert out.shape == (B, OUT) and attn.shape == (B, BAG)
    # Slightly looser rtol: the GAP->matmul fold reorders the fp32 reduction.
    assert jnp.allclose(out, ref_out, rtol=1e-4, atol=1e-5)
    assert jnp.allclose(attn, ref_attn, rtol=1e-4, atol=1e-5)

    print("KERNEL_OK")
</pallas_src>

<mosaic_0001>
module attributes {stable_mosaic.version = 11 : i64} {
  func.func @aggregation_kernel(%arg0: i32, %arg1: memref<1x4x1024xf32, #tpu.memory_space<vmem>>, %arg2: memref<1024x32xf32, #tpu.memory_space<vmem>>, %arg3: memref<1x32xf32, #tpu.memory_space<vmem>>, %arg4: memref<32x16xf32, #tpu.memory_space<vmem>>, %arg5: memref<1x16xf32, #tpu.memory_space<vmem>>, %arg6: memref<32x16xf32, #tpu.memory_space<vmem>>, %arg7: memref<1x16xf32, #tpu.memory_space<vmem>>, %arg8: memref<16x1xf32, #tpu.memory_space<vmem>>, %arg9: memref<1x1xf32, #tpu.memory_space<vmem>>, %arg10: memref<1x1x1xf32, #tpu.memory_space<vmem>>, %arg11: memref<1x4x1xf32, #tpu.memory_space<vmem>>) attributes {dimension_semantics = [#tpu.dimension_semantics<parallel>], iteration_bounds = array<i64: 2>, scalar_prefetch = 0 : i64, scratch_operands = 0 : i64, tpu.core_type = #tpu.core_type<tc>, window_params = [{transform_indices = @transform_0, window_bounds = array<i64: 1, 4, 1024>}, {pipeline_mode = #tpu.pipeline_mode<synchronous>, transform_indices = @transform_1, window_bounds = array<i64: 1024, 32>}, {pipeline_mode = #tpu.pipeline_mode<synchronous>, transform_indices = @transform_2, window_bounds = array<i64: 1, 32>}, {pipeline_mode = #tpu.pipeline_mode<synchronous>, transform_indices = @transform_3, window_bounds = array<i64: 32, 16>}, {pipeline_mode = #tpu.pipeline_mode<synchronous>, transform_indices = @transform_4, window_bounds = array<i64: 1, 16>}, {pipeline_mode = #tpu.pipeline_mode<synchronous>, transform_indices = @transform_5, window_bounds = array<i64: 32, 16>}, {pipeline_mode = #tpu.pipeline_mode<synchronous>, transform_indices = @transform_6, window_bounds = array<i64: 1, 16>}, {pipeline_mode = #tpu.pipeline_mode<synchronous>, transform_indices = @transform_7, window_bounds = array<i64: 16, 1>}, {pipeline_mode = #tpu.pipeline_mode<synchronous>, transform_indices = @transform_8, window_bounds = array<i64: 1, 1>}, {transform_indices = @transform_9, window_bounds = array<i64: 1, 1, 1>}, {transform_indices = @transform_10, window_bounds = array<i64: 1, 4, 1>}]} {
    %c0 = arith.constant 0 : index
    %c0_0 = arith.constant 0 : index
    %c0_1 = arith.constant 0 : index
    %0 = vector.load %arg1[%c0, %c0_0, %c0_1] : memref<1x4x1024xf32, #tpu.memory_space<vmem>>, vector<1x4x1024xf32>
    %1 = vector.shape_cast %0 : vector<1x4x1024xf32> to vector<4x1024xf32>
    %c0_2 = arith.constant 0 : index
    %c0_3 = arith.constant 0 : index
    %2 = vector.load %arg2[%c0_2, %c0_3] : memref<1024x32xf32, #tpu.memory_space<vmem>>, vector<1024x32xf32>
    %cst = arith.constant dense<0.000000e+00> : vector<4x32xf32>
    %3 = tpu.matmul %1, %2, %cst {dimension_numbers = #tpu.dot_dimension_numbers<[1], [0], [0], [1], [0, 0, 1, 1], [], []>} : vector<4x1024xf32>, vector<1024x32xf32>, vector<4x32xf32> -> vector<4x32xf32>
    %c0_4 = arith.constant 0 : index
    %c0_5 = arith.constant 0 : index
    %4 = vector.load %arg3[%c0_4, %c0_5] : memref<1x32xf32, #tpu.memory_space<vmem>>, vector<1x32xf32>
    %5 = vector.broadcast %4 : vector<1x32xf32> to vector<4x32xf32>
    %6 = arith.addf %3, %5 : vector<4x32xf32>
    %c0_6 = arith.constant 0 : index
    %c0_7 = arith.constant 0 : index
    %7 = vector.load %arg4[%c0_6, %c0_7] : memref<32x16xf32, #tpu.memory_space<vmem>>, vector<32x16xf32>
    %cst_8 = arith.constant dense<0.000000e+00> : vector<4x16xf32>
    %8 = tpu.matmul %6, %7, %cst_8 {dimension_numbers = #tpu.dot_dimension_numbers<[1], [0], [0], [1], [0, 0, 1, 1], [], []>} : vector<4x32xf32>, vector<32x16xf32>, vector<4x16xf32> -> vector<4x16xf32>
    %9 = math.tanh %8 : vector<4x16xf32>
    %c0_9 = arith.constant 0 : index
    %c0_10 = arith.constant 0 : index
    %10 = vector.load %arg5[%c0_9, %c0_10] : memref<1x16xf32, #tpu.memory_space<vmem>>, vector<1x16xf32>
    %11 = vector.broadcast %10 : vector<1x16xf32> to vector<4x16xf32>
    %12 = arith.mulf %9, %11 : vector<4x16xf32>
    %cst_11 = arith.constant dense<0.000000e+00> : vector<4xf32>
    %13 = vector.multi_reduction <add>, %12, %cst_11 [1] : vector<4x16xf32> to vector<4xf32>
    %14 = vector.shape_cast %13 : vector<4xf32> to vector<4x1xf32>
    %cst_12 = arith.constant dense<0xFF800000> : vector<1xf32>
    %15 = vector.multi_reduction <maximumf>, %14, %cst_12 [0] : vector<4x1xf32> to vector<1xf32>
    %16 = vector.shape_cast %15 : vector<1xf32> to vector<1x1xf32>
    %17 = vector.broadcast %16 : vector<1x1xf32> to vector<4x1xf32>
    %18 = arith.subf %14, %17 : vector<4x1xf32>
    %19 = math.exp %18 : vector<4x1xf32>
    %cst_13 = arith.constant dense<0.000000e+00> : vector<1xf32>
    %20 = vector.multi_reduction <add>, %19, %cst_13 [0] : vector<4x1xf32> to vector<1xf32>
    %21 = vector.shape_cast %20 : vector<1xf32> to vector<1x1xf32>
    %22 = vector.broadcast %21 : vector<1x1xf32> to vector<4x1xf32>
    %23 = arith.divf %19, %22 : vector<4x1xf32>
    %24 = vector.broadcast %23 : vector<4x1xf32> to vector<4x32xf32>
    %25 = arith.mulf %24, %6 : vector<4x32xf32>
    %cst_14 = arith.constant dense<0.000000e+00> : vector<32xf32>
    %26 = vector.multi_reduction <add>, %25, %cst_14 [0] : vector<4x32xf32> to vector<32xf32>
    %27 = vector.shape_cast %26 : vector<32xf32> to vector<1x32xf32>
    %cst_15 = arith.constant 2.500000e-01 : f32
    %28 = vector.broadcast %cst_15 : f32 to vector<1x32xf32>
    %29 = arith.mulf %27, %28 : vector<1x32xf32>
    %c0_16 = arith.constant 0 : index
    %c0_17 = arith.constant 0 : index
    %30 = vector.load %arg6[%c0_16, %c0_17] : memref<32x16xf32, #tpu.memory_space<vmem>>, vector<32x16xf32>
    %cst_18 = arith.constant dense<0.000000e+00> : vector<1x16xf32>
    %31 = tpu.matmul %29, %30, %cst_18 {dimension_numbers = #tpu.dot_dimension_numbers<[1], [0], [0], [1], [0, 0, 1, 1], [], []>} : vector<1x32xf32>, vector<32x16xf32>, vector<1x16xf32> -> vector<1x16xf32>
    %c0_19 = arith.constant 0 : index
    %c0_20 = arith.constant 0 : index
    %32 = vector.load %arg7[%c0_19, %c0_20] : memref<1x16xf32, #tpu.memory_space<vmem>>, vector<1x16xf32>
    %33 = arith.addf %31, %32 : vector<1x16xf32>
    %c0_21 = arith.constant 0 : index
    %c0_22 = arith.constant 0 : index
    %34 = vector.load %arg8[%c0_21, %c0_22] : memref<16x1xf32, #tpu.memory_space<vmem>>, vector<16x1xf32>
    %cst_23 = arith.constant dense<0.000000e+00> : vector<1x1xf32>
    %35 = tpu.matmul %33, %34, %cst_23 {dimension_numbers = #tpu.dot_dimension_numbers<[1], [0], [0], [1], [0, 0, 1, 1], [], []>} : vector<1x16xf32>, vector<16x1xf32>, vector<1x1xf32> -> vector<1x1xf32>
    %c0_24 = arith.constant 0 : index
    %c0_25 = arith.constant 0 : index
    %36 = vector.load %arg9[%c0_24, %c0_25] : memref<1x1xf32, #tpu.memory_space<vmem>>, vector<1x1xf32>
    %37 = arith.addf %35, %36 : vector<1x1xf32>
    %c0_26 = arith.constant 0 : index
    %c0_27 = arith.constant 0 : index
    %c0_28 = arith.constant 0 : index
    %38 = vector.load %arg10[%c0_26, %c0_27, %c0_28] : memref<1x1x1xf32, #tpu.memory_space<vmem>>, vector<1x1x1xf32>
    %39 = vector.shape_cast %38 : vector<1x1x1xf32> to vector<1x1xf32>
    %40 = vector.shape_cast %37 : vector<1x1xf32> to vector<1x1x1xf32>
    tpu.vector_store %arg10[%c0_26, %c0_27, %c0_28], %40 {strides = array<i32>} : memref<1x1x1xf32, #tpu.memory_space<vmem>>, vector<1x1x1xf32>,
    %c0_29 = arith.constant 0 : index
    %c0_30 = arith.constant 0 : index
    %c0_31 = arith.constant 0 : index
    %41 = vector.load %arg11[%c0_29, %c0_30, %c0_31] : memref<1x4x1xf32, #tpu.memory_space<vmem>>, vector<1x4x1xf32>
    %42 = vector.shape_cast %41 : vector<1x4x1xf32> to vector<4x1xf32>
    %43 = vector.shape_cast %23 : vector<4x1xf32> to vector<1x4x1xf32>
    tpu.vector_store %arg11[%c0_29, %c0_30, %c0_31], %43 {strides = array<i32>} : memref<1x4x1xf32, #tpu.memory_space<vmem>>, vector<1x4x1xf32>,
    return
  }
  func.func @transform_0(%arg0: i32) -> (i32, i32, i32) {
    %c0_i32 = arith.constant 0 : i32
    %c0_i32_0 = arith.constant 0 : i32
    %c0_i32_1 = arith.constant 0 : i32
    return %arg0, %c0_i32, %c0_i32_0 : i32, i32, i32
  }
  func.func @transform_1(%arg0: i32) -> (i32, i32) {
    %c0_i32 = arith.constant 0 : i32
    %c0_i32_0 = arith.constant 0 : i32
    %c0_i32_1 = arith.constant 0 : i32
    return %c0_i32, %c0_i32_0 : i32, i32
  }
  func.func @transform_2(%arg0: i32) -> (i32, i32) {
    %c0_i32 = arith.constant 0 : i32
    %c0_i32_0 = arith.constant 0 : i32
    %c0_i32_1 = arith.constant 0 : i32
    return %c0_i32, %c0_i32_0 : i32, i32
  }
  func.func @transform_3(%arg0: i32) -> (i32, i32) {
    %c0_i32 = arith.constant 0 : i32
    %c0_i32_0 = arith.constant 0 : i32
    %c0_i32_1 = arith.constant 0 : i32
    return %c0_i32, %c0_i32_0 : i32, i32
  }
  func.func @transform_4(%arg0: i32) -> (i32, i32) {
    %c0_i32 = arith.constant 0 : i32
    %c0_i32_0 = arith.constant 0 : i32
    %c0_i32_1 = arith.constant 0 : i32
    return %c0_i32, %c0_i32_0 : i32, i32
  }
  func.func @transform_5(%arg0: i32) -> (i32, i32) {
    %c0_i32 = arith.constant 0 : i32
    %c0_i32_0 = arith.constant 0 : i32
    %c0_i32_1 = arith.constant 0 : i32
    return %c0_i32, %c0_i32_0 : i32, i32
  }
  func.func @transform_6(%arg0: i32) -> (i32, i32) {
    %c0_i32 = arith.constant 0 : i32
    %c0_i32_0 = arith.constant 0 : i32
    %c0_i32_1 = arith.constant 0 : i32
    return %c0_i32, %c0_i32_0 : i32, i32
  }
  func.func @transform_7(%arg0: i32) -> (i32, i32) {
    %c0_i32 = arith.constant 0 : i32
    %c0_i32_0 = arith.constant 0 : i32
    %c0_i32_1 = arith.constant 0 : i32
    return %c0_i32, %c0_i32_0 : i32, i32
  }
  func.func @transform_8(%arg0: i32) -> (i32, i32) {
    %c0_i32 = arith.constant 0 : i32
    %c0_i32_0 = arith.constant 0 : i32
    %c0_i32_1 = arith.constant 0 : i32
    return %c0_i32, %c0_i32_0 : i32, i32
  }
  func.func @transform_9(%arg0: i32) -> (i32, i32, i32) {
    %c0_i32 = arith.constant 0 : i32
    %c0_i32_0 = arith.constant 0 : i32
    %c0_i32_1 = arith.constant 0 : i32
    return %arg0, %c0_i32, %c0_i32_0 : i32, i32, i32
  }
  func.func @transform_10(%arg0: i32) -> (i32, i32, i32) {
    %c0_i32 = arith.constant 0 : i32
    %c0_i32_0 = arith.constant 0 : i32
    %c0_i32_1 = arith.constant 0 : i32
    return %arg0, %c0_i32, %c0_i32_0 : i32, i32, i32
  }
}

</mosaic_0001>

<llo_original>
// kernel: tpu_custom_call.1
$region0: #{tpu_custom_call.1}
  #allocation0 [shape = 'u32[]', space=smem, size = 0x4, offset = 0x4, fixed_abs, tag = 'smem constant byte address 0x4 - core index']
  #allocation1 [shape = 'u32[144,128]{1,0:T(1,128)}', space=vmem, size = 0x12000, scoped, tag = 'internal scratch']
  #allocation2 [shape = 'f32[1,1]{1,0:T(1,128)S(1)}', space=vmem, size = 0x200, scoped, tag = 'scoped memory for tpu_custom_call.1']
  %s0 = inlined_call_operand.vmem [shape: f32[2,4,1024], index: 0, kind: input, shape index: {}]
  %s1 = inlined_call_operand.vmem [shape: f32[1024,32], index: 1, kind: input, shape index: {}]
  %s2 = inlined_call_operand.vmem [shape: f32[1,32], index: 2, kind: input, shape index: {}]
  %s3 = inlined_call_operand.vmem [shape: f32[32,16], index: 3, kind: input, shape index: {}]
  %s4 = inlined_call_operand.vmem [shape: f32[1,16], index: 4, kind: input, shape index: {}]
  %s5 = inlined_call_operand.vmem [shape: f32[32,16], index: 5, kind: input, shape index: {}]
  %s6 = inlined_call_operand.vmem [shape: f32[1,16], index: 6, kind: input, shape index: {}]
  %s7 = inlined_call_operand.vmem [shape: f32[16,1], index: 7, kind: input, shape index: {}]
  %s8 = inlined_call_operand.<no memory space> [shape: f32[1,1], index: 8, kind: input, shape index: {}]
  %s9 = inlined_call_operand.vmem [shape: f32[2,1,1], index: 9, kind: output, shape index: {0}]
  %s10 = inlined_call_operand.vmem [shape: f32[2,4,1], index: 10, kind: output, shape index: {1}]
  %11 = xla_tuple %s9, %s10
  %s12 = sld [smem:[#allocation0]]
  $region77: #{tpu_custom_call.1} parent=0
    _
  %s14 = ssub.s32 1, %s12
  %s15 = scalar_select 0, %s14, %s12
  %v16 = vstv %s8
  %17 = vst [vmem:[#allocation2] sm:$0x1] %v16
  loop: start=0, step=1, limit=4
  $region2: #{tpu_custom_call.1} parent=0 // loop_pre_header
    _
  $region3: #{tpu_custom_call.1} parent=0 // loop_header
    %s19 = sphi 0, %s23
    %p20 = scmp.ge.s32.totalorder %s19, 4
    %s29 = sphi 0, %s31
    %s32 = sphi 0, %s29
    %s33 = sphi 0, %s32
    %s49 = sphi 0, %s33
    %s53 = sphi 0, %s53
    %s55 = sphi 0, %s53
    %s56 = sphi 0, %s55
    %s70 = sphi 0, %s56
    %s74 = sphi 0, %s74
    %s76 = sphi 0, %s74
    %s77 = sphi 0, %s76
    %s91 = sphi 0, %s77
    %s95 = sphi 0, %s95
    %s97 = sphi 0, %s95
    %s98 = sphi 0, %s97
    %s112 = sphi 0, %s98
    %s116 = sphi 0, %s116
    %s118 = sphi 0, %s116
    %s119 = sphi 0, %s118
    %s133 = sphi 0, %s119
    %s137 = sphi 0, %s137
    %s139 = sphi 0, %s137
    %s140 = sphi 0, %s139
    %s154 = sphi 0, %s140
    %s158 = sphi 0, %s158
    %s160 = sphi 0, %s158
    %s161 = sphi 0, %s160
    %s175 = sphi 0, %s161
    %s179 = sphi 0, %s179
    %s181 = sphi 0, %s179
    %s182 = sphi 0, %s181
    %s196 = sphi 0, %s182
    %s200 = sphi 0, %s200
    %s202 = sphi 0, %s200
    %s203 = sphi 0, %s202
    %s217 = sphi 0, %s203
    %s223 = sphi 0, %s225
    %s226 = sphi 0, %s223
    %s227 = sphi 0, %s226
    %s243 = sphi 0, %s227
    %s249 = sphi 0, %s251
    %s252 = sphi 0, %s249
    %s253 = sphi 0, %s252
    %s269 = sphi 0, %s253
  $region4: #{tpu_custom_call.1} parent=0 // loop_header_branch
    %22 = sbr.rel (%p20) target = $region8
  $region5: #{tpu_custom_call.1} parent=0 // loop_body
    %s24 = ssub.s32 %s19, 1
    %s25 = ssub.s32 %s19, 2
    %s26 = sadd.s32 %s19, 1
    %s27 = ssub.s32 %s19, %s26
    %p28 = scmp.eq.s32.totalorder %s27, 0
    %s30 = sadd.s32 %s29, 1
    %s31 = scalar_select %p28, %s29, %s30
    %p34 = pneg %p28
    %p35 = scmp.eq.s32.totalorder %s19, 1
    %p36 = por %p34, %p35
    %p37 = scmp.ne.s32.totalorder %s29, %s32
    %p38 = scmp.eq.s32.totalorder %s19, 0
    %p39 = por %p37, %p38
    %p40 = scmp.ne.s32.totalorder %s29, %s32
    %p41 = scmp.eq.s32.totalorder %s24, 1
    %p42 = por %p40, %p41
    %p43 = scmp.ne.s32.totalorder %s32, %s33
    %p44 = scmp.eq.s32.totalorder %s24, 0
    %p45 = por %p43, %p44
    %p46 = scmp.ne.s32.totalorder %s32, %s33
    %p47 = scmp.eq.s32.totalorder %s25, 1
    %p48 = por %p46, %p47
    %p50 = scmp.ne.s32.totalorder %s33, %s49
    %p51 = scmp.eq.s32.totalorder %s25, 0
    %p52 = por %p50, %p51
    %s54 = sadd.s32 %s53, 1
    %p57 = scmp.eq.s32.totalorder %s19, 1
    %p58 = scmp.ne.s32.totalorder %s53, %s55
    %p59 = scmp.eq.s32.totalorder %s19, 0
    %p60 = por %p58, %p59
    %p61 = scmp.ne.s32.totalorder %s53, %s55
    %p62 = scmp.eq.s32.totalorder %s24, 1
    %p63 = por %p61, %p62
    %p64 = scmp.ne.s32.totalorder %s55, %s56
    %p65 = scmp.eq.s32.totalorder %s24, 0
    %p66 = por %p64, %p65
    %p67 = scmp.ne.s32.totalorder %s55, %s56
    %p68 = scmp.eq.s32.totalorder %s25, 1
    %p69 = por %p67, %p68
    %p71 = scmp.ne.s32.totalorder %s56, %s70
    %p72 = scmp.eq.s32.totalorder %s25, 0
    %p73 = por %p71, %p72
    %s75 = sadd.s32 %s74, 1
    %p78 = scmp.eq.s32.totalorder %s19, 1
    %p79 = scmp.ne.s32.totalorder %s74, %s76
    %p80 = scmp.eq.s32.totalorder %s19, 0
    %p81 = por %p79, %p80
    %p82 = scmp.ne.s32.totalorder %s74, %s76
    %p83 = scmp.eq.s32.totalorder %s24, 1
    %p84 = por %p82, %p83
    %p85 = scmp.ne.s32.totalorder %s76, %s77
    %p86 = scmp.eq.s32.totalorder %s24, 0
    %p87 = por %p85, %p86
    %p88 = scmp.ne.s32.totalorder %s76, %s77
    %p89 = scmp.eq.s32.totalorder %s25, 1
    %p90 = por %p88, %p89
    %p92 = scmp.ne.s32.totalorder %s77, %s91
    %p93 = scmp.eq.s32.totalorder %s25, 0
    %p94 = por %p92, %p93
    %s96 = sadd.s32 %s95, 1
    %p99 = scmp.eq.s32.totalorder %s19, 1
    %p100 = scmp.ne.s32.totalorder %s95, %s97
    %p101 = scmp.eq.s32.totalorder %s19, 0
    %p102 = por %p100, %p101
    %p103 = scmp.ne.s32.totalorder %s95, %s97
    %p104 = scmp.eq.s32.totalorder %s24, 1
    %p105 = por %p103, %p104
    %p106 = scmp.ne.s32.totalorder %s97, %s98
    %p107 = scmp.eq.s32.totalorder %s24, 0
    %p108 = por %p106, %p107
    %p109 = scmp.ne.s32.totalorder %s97, %s98
    %p110 = scmp.eq.s32.totalorder %s25, 1
    %p111 = por %p109, %p110
    %p113 = scmp.ne.s32.totalorder %s98, %s112
    %p114 = scmp.eq.s32.totalorder %s25, 0
    %p115 = por %p113, %p114
    %s117 = sadd.s32 %s116, 1
    %p120 = scmp.eq.s32.totalorder %s19, 1
    %p121 = scmp.ne.s32.totalorder %s116, %s118
    %p122 = scmp.eq.s32.totalorder %s19, 0
    %p123 = por %p121, %p122
    %p124 = scmp.ne.s32.totalorder %s116, %s118
    %p125 = scmp.eq.s32.totalorder %s24, 1
    %p126 = por %p124, %p125
    %p127 = scmp.ne.s32.totalorder %s118, %s119
    %p128 = scmp.eq.s32.totalorder %s24, 0
    %p129 = por %p127, %p128
    %p130 = scmp.ne.s32.totalorder %s118, %s119
    %p131 = scmp.eq.s32.totalorder %s25, 1
    %p132 = por %p130, %p131
    %p134 = scmp.ne.s32.totalorder %s119, %s133
    %p135 = scmp.eq.s32.totalorder %s25, 0
    %p136 = por %p134, %p135
    %s138 = sadd.s32 %s137, 1
    %p141 = scmp.eq.s32.totalorder %s19, 1
    %p142 = scmp.ne.s32.totalorder %s137, %s139
    %p143 = scmp.eq.s32.totalorder %s19, 0
    %p144 = por %p142, %p143
    %p145 = scmp.ne.s32.totalorder %s137, %s139
    %p146 = scmp.eq.s32.totalorder %s24, 1
    %p147 = por %p145, %p146
    %p148 = scmp.ne.s32.totalorder %s139, %s140
    %p149 = scmp.eq.s32.totalorder %s24, 0
    %p150 = por %p148, %p149
    %p151 = scmp.ne.s32.totalorder %s139, %s140
    %p152 = scmp.eq.s32.totalorder %s25, 1
    %p153 = por %p151, %p152
    %p155 = scmp.ne.s32.totalorder %s140, %s154
    %p156 = scmp.eq.s32.totalorder %s25, 0
    %p157 = por %p155, %p156
    %s159 = sadd.s32 %s158, 1
    %p162 = scmp.eq.s32.totalorder %s19, 1
    %p163 = scmp.ne.s32.totalorder %s158, %s160
    %p164 = scmp.eq.s32.totalorder %s19, 0
    %p165 = por %p163, %p164
    %p166 = scmp.ne.s32.totalorder %s158, %s160
    %p167 = scmp.eq.s32.totalorder %s24, 1
    %p168 = por %p166, %p167
    %p169 = scmp.ne.s32.totalorder %s160, %s161
    %p170 = scmp.eq.s32.totalorder %s24, 0
    %p171 = por %p169, %p170
    %p172 = scmp.ne.s32.totalorder %s160, %s161
    %p173 = scmp.eq.s32.totalorder %s25, 1
    %p174 = por %p172, %p173
    %p176 = scmp.ne.s32.totalorder %s161, %s175
    %p177 = scmp.eq.s32.totalorder %s25, 0
    %p178 = por %p176, %p177
    %s180 = sadd.s32 %s179, 1
    %p183 = scmp.eq.s32.totalorder %s19, 1
    %p184 = scmp.ne.s32.totalorder %s179, %s181
    %p185 = scmp.eq.s32.totalorder %s19, 0
    %p186 = por %p184, %p185
    %p187 = scmp.ne.s32.totalorder %s179, %s181
    %p188 = scmp.eq.s32.totalorder %s24, 1
    %p189 = por %p187, %p188
    %p190 = scmp.ne.s32.totalorder %s181, %s182
    %p191 = scmp.eq.s32.totalorder %s24, 0
    %p192 = por %p190, %p191
    %p193 = scmp.ne.s32.totalorder %s181, %s182
    %p194 = scmp.eq.s32.totalorder %s25, 1
    %p195 = por %p193, %p194
    %p197 = scmp.ne.s32.totalorder %s182, %s196
    %p198 = scmp.eq.s32.totalorder %s25, 0
    %p199 = por %p197, %p198
    %s201 = sadd.s32 %s200, 1
    %p204 = scmp.eq.s32.totalorder %s19, 1
    %p205 = scmp.ne.s32.totalorder %s200, %s202
    %p206 = scmp.eq.s32.totalorder %s19, 0
    %p207 = por %p205, %p206
    %p208 = scmp.ne.s32.totalorder %s200, %s202
    %p209 = scmp.eq.s32.totalorder %s24, 1
    %p210 = por %p208, %p209
    %p211 = scmp.ne.s32.totalorder %s202, %s203
    %p212 = scmp.eq.s32.totalorder %s24, 0
    %p213 = por %p211, %p212
    %p214 = scmp.ne.s32.totalorder %s202, %s203
    %p215 = scmp.eq.s32.totalorder %s25, 1
    %p216 = por %p214, %p215
    %p218 = scmp.ne.s32.totalorder %s203, %s217
    %p219 = scmp.eq.s32.totalorder %s25, 0
    %p220 = por %p218, %p219
    %s221 = ssub.s32 %s19, %s26
    %p222 = scmp.eq.s32.totalorder %s221, 0
    %s224 = sadd.s32 %s223, 1
    %s225 = scalar_select %p222, %s223, %s224
    %p228 = pneg %p222
    %p229 = scmp.eq.s32.totalorder %s19, 1
    %p230 = por %p228, %p229
    %p231 = scmp.ne.s32.totalorder %s223, %s226
    %p232 = scmp.eq.s32.totalorder %s19, 0
    %p233 = por %p231, %p232
    %p234 = scmp.ne.s32.totalorder %s223, %s226
    %p235 = scmp.eq.s32.totalorder %s24, 1
    %p236 = por %p234, %p235
    %p237 = scmp.ne.s32.totalorder %s226, %s227
    %p238 = scmp.eq.s32.totalorder %s24, 0
    %p239 = por %p237, %p238
    %p240 = scmp.ne.s32.totalorder %s226, %s227
    %p241 = scmp.eq.s32.totalorder %s25, 1
    %p242 = por %p240, %p241
    %p244 = scmp.ne.s32.totalorder %s227, %s243
    %p245 = scmp.eq.s32.totalorder %s25, 0
    %p246 = por %p244, %p245
    %s247 = ssub.s32 %s19, %s26
    %p248 = scmp.eq.s32.totalorder %s247, 0
    %s250 = sadd.s32 %s249, 1
    %s251 = scalar_select %p248, %s249, %s250
    %p254 = pneg %p248
    %p255 = scmp.eq.s32.totalorder %s19, 1
    %p256 = por %p254, %p255
    %p257 = scmp.ne.s32.totalorder %s249, %s252
    %p258 = scmp.eq.s32.totalorder %s19, 0
    %p259 = por %p257, %p258
    %p260 = scmp.ne.s32.totalorder %s249, %s252
    %p261 = scmp.eq.s32.totalorder %s24, 1
    %p262 = por %p260, %p261
    %p263 = scmp.ne.s32.totalorder %s252, %s253
    %p264 = scmp.eq.s32.totalorder %s24, 0
    %p265 = por %p263, %p264
    %p266 = scmp.ne.s32.totalorder %s252, %s253
    %p267 = scmp.eq.s32.totalorder %s25, 1
    %p268 = por %p266, %p267
    %p270 = scmp.ne.s32.totalorder %s253, %s269
    %p271 = scmp.eq.s32.totalorder %s25, 0
    %p272 = por %p270, %p271
    %p273 = scmp.le.s32.totalorder 1, %s19
    %p274 = scmp.lt.s32.totalorder %s19, 3
    %p275 = pnand %p273, %p274
    %p276 = pneg %p275
    // Predicated region
    $region9: #{tpu_custom_call.1} parent=5 // pred_check
      _
    $region10: #{tpu_custom_call.1} parent=5 // pred_check_branch
      %278 = sbr.rel (%p275) target = $region12
    $region11: #{tpu_custom_call.1} parent=5 // pred_region
      %s279 = ssub.s32 %s19, 1
      // Predicated region
      $region13: #{tpu_custom_call.1} parent=11 // pred_check
        %p280 = pneg %p66
      $region14: #{tpu_custom_call.1} parent=11 // pred_check_branch
        %282 = sbr.rel (%p280) target = $region16
      $region15: #{tpu_custom_call.1} parent=11 // pred_region
        _
      $region16: #{tpu_custom_call.1} parent=11 // pred_fallthru
        _
      // Predicated region
      $region17: #{tpu_custom_call.1} parent=11 // pred_check
        %p283 = pneg %p87
      $region18: #{tpu_custom_call.1} parent=11 // pred_check_branch
        %285 = sbr.rel (%p283) target = $region20
      $region19: #{tpu_custom_call.1} parent=11 // pred_region
        _
      $region20: #{tpu_custom_call.1} parent=11 // pred_fallthru
        _
      // Predicated region
      $region21: #{tpu_custom_call.1} parent=11 // pred_check
        %p286 = pneg %p108
      $region22: #{tpu_custom_call.1} parent=11 // pred_check_branch
        %288 = sbr.rel (%p286) target = $region24
      $region23: #{tpu_custom_call.1} parent=11 // pred_region
        _
      $region24: #{tpu_custom_call.1} parent=11 // pred_fallthru
        _
      // Predicated region
      $region25: #{tpu_custom_call.1} parent=11 // pred_check
        %p289 = pneg %p129
      $region26: #{tpu_custom_call.1} parent=11 // pred_check_branch
        %291 = sbr.rel (%p289) target = $region28
      $region27: #{tpu_custom_call.1} parent=11 // pred_region
        _
      $region28: #{tpu_custom_call.1} parent=11 // pred_fallthru
        _
      // Predicated region
      $region29: #{tpu_custom_call.1} parent=11 // pred_check
        %p292 = pneg %p150
      $region30: #{tpu_custom_call.1} parent=11 // pred_check_branch
        %294 = sbr.rel (%p292) target = $region32
      $region31: #{tpu_custom_call.1} parent=11 // pred_region
        _
      $region32: #{tpu_custom_call.1} parent=11 // pred_fallthru
        _
      // Predicated region
      $region33: #{tpu_custom_call.1} parent=11 // pred_check
        %p295 = pneg %p171
      $region34: #{tpu_custom_call.1} parent=11 // pred_check_branch
        %297 = sbr.rel (%p295) target = $region36
      $region35: #{tpu_custom_call.1} parent=11 // pred_region
        _
      $region36: #{tpu_custom_call.1} parent=11 // pred_fallthru
        _
      // Predicated region
      $region37: #{tpu_custom_call.1} parent=11 // pred_check
        %p298 = pneg %p192
      $region38: #{tpu_custom_call.1} parent=11 // pred_check_branch
        %300 = sbr.rel (%p298) target = $region40
      $region39: #{tpu_custom_call.1} parent=11 // pred_region
        _
      $region40: #{tpu_custom_call.1} parent=11 // pred_fallthru
        _
      // Predicated region
      $region41: #{tpu_custom_call.1} parent=11 // pred_check
        %p301 = pneg %p213
      $region42: #{tpu_custom_call.1} parent=11 // pred_check_branch
        %303 = sbr.rel (%p301) target = $region44
      $region43: #{tpu_custom_call.1} parent=11 // pred_region
        _
      $region44: #{tpu_custom_call.1} parent=11 // pred_fallthru
        _
    $region12: #{tpu_custom_call.1} parent=5 // pred_fallthru
      _
    %p304 = scmp.lt.s32.totalorder %s19, 2
    // Predicated region
    $region45: #{tpu_custom_call.1} parent=5 // pred_check
      %p305 = pneg %p304
    $region46: #{tpu_custom_call.1} parent=5 // pred_check_branch
      %307 = sbr.rel (%p305) target = $region48
    $region47: #{tpu_custom_call.1} parent=5 // pred_region
      // Predicated region
      $region49: #{tpu_custom_call.1} parent=47 // pred_check
        %p308 = pneg %p39
      $region50: #{tpu_custom_call.1} parent=47 // pred_check_branch
        %310 = sbr.rel (%p308) target = $region52
      $region51: #{tpu_custom_call.1} parent=47 // pred_region
        %p311 = scmp.lt.s32.totalorder %s19, 1
        %s312 = scalar_select %p311, %s19, 1
        %s313 = smul.addr %s312, 8
        %s314 = smul.addr %s313, 4
        %s315 = scalar_lea.vmem %s0, %s314
      $region52: #{tpu_custom_call.1} parent=47 // pred_fallthru
        _
    $region48: #{tpu_custom_call.1} parent=5 // pred_fallthru
      _
    %p316 = scmp.le.s32.totalorder 1, %s19
    %p317 = scmp.lt.s32.totalorder %s19, 3
    %p318 = pnand %p316, %p317
    %p319 = pneg %p318
    // Predicated region
    $region53: #{tpu_custom_call.1} parent=5 // pred_check
      _
    $region54: #{tpu_custom_call.1} parent=5 // pred_check_branch
      %321 = sbr.rel (%p318) target = $region56
    $region55: #{tpu_custom_call.1} parent=5 // pred_region
      %s322 = ssub.s32 %s19, 1
      %p323 = scmp.lt.s32.totalorder %s24, 1
      %s324 = scalar_select %p323, %s24, 1
      %s325 = smul.addr %s324, 8
      %s326 = smul.addr %s325, 4
      %s327 = scalar_lea.vmem %s0, %s326
      %p328 = pneg %p45
      %p329 = pneg %p42
      %p330 = pneg %p66
      %p331 = pneg %p63
      %p332 = pneg %p87
      %p333 = pneg %p84
      %p334 = pneg %p108
      %p335 = pneg %p105
      %p336 = pneg %p129
      %p337 = pneg %p126
      %p338 = pneg %p150
      %p339 = pneg %p147
      %p340 = pneg %p171
      %p341 = pneg %p168
      %p342 = pneg %p192
      %p343 = pneg %p189
      %p344 = pneg %p213
      %p345 = pneg %p210
      %p346 = pneg %p239
      %p347 = pneg %p236
      %p348 = scmp.lt.s32.totalorder %s24, 1
      %s349 = scalar_select %p348, %s24, 1
      %s350 = scalar_lea.vmem %s9, %s349
      %p351 = pneg %p265
      %p352 = pneg %p262
      %p353 = scmp.lt.s32.totalorder %s24, 1
      %s354 = scalar_select %p353, %s24, 1
      %s355 = smul.addr %s354, 4
      %s356 = scalar_lea.vmem %s10, %s355
      %p357 = scmp.lt.s32.totalorder %s24, 1
      %s358 = scalar_select %p357, %s24, 1
      %s359 = smul.addr %s358, 8
      %s360 = smul.addr %s359, 4
      %s361 = scalar_lea.vmem %s0, %s360
      %p362 = scmp.lt.s32.totalorder %s24, 1
      %s363 = scalar_select %p362, %s24, 1
      %s364 = scalar_lea.vmem %s9, %s363
      %p365 = scmp.lt.s32.totalorder %s24, 1
      %s366 = scalar_select %p365, %s24, 1
      %s367 = smul.addr %s366, 4
      %s368 = scalar_lea.vmem %s10, %s367
      %v369 = vld [vmem:[%s361] sm:$0xff]
      %v370 = vld [vmem:[%s361 + $0x8] sm:$0xff]
      %v371 = vld [vmem:[%s361 + $0x10] sm:$0xff]
      %v372 = vld [vmem:[%s361 + $0x18] sm:$0xff]
      %v373 = vld [vmem:[%s1] sm:$0xff]
      %v374 = vld [vmem:[%s1 + $0x8] sm:$0xff]
      %v375 = vld [vmem:[%s1 + $0x10] sm:$0xff]
      %v376 = vld [vmem:[%s1 + $0x18] sm:$0xff]
      %v377 = vld [vmem:[%s1 + $0x20] sm:$0xff]
      %v378 = vld [vmem:[%s1 + $0x28] sm:$0xff]
      %v379 = vld [vmem:[%s1 + $0x30] sm:$0xff]
      %v380 = vld [vmem:[%s1 + $0x38] sm:$0xff]
      %v381 = vld [vmem:[%s1 + $0x40] sm:$0xff]
      %v382 = vld [vmem:[%s1 + $0x48] sm:$0xff]
      %v383 = vld [vmem:[%s1 + $0x50] sm:$0xff]
      %v384 = vld [vmem:[%s1 + $0x58] sm:$0xff]
      %v385 = vld [vmem:[%s1 + $0x60] sm:$0xff]
      %v386 = vld [vmem:[%s1 + $0x68] sm:$0xff]
      %v387 = vld [vmem:[%s1 + $0x70] sm:$0xff]
      %v388 = vld [vmem:[%s1 + $0x78] sm:$0xff]
      %v389 = vld [vmem:[%s1 + $0x80] sm:$0xff]
      %v390 = vld [vmem:[%s1 + $0x88] sm:$0xff]
      %v391 = vld [vmem:[%s1 + $0x90] sm:$0xff]
      %v392 = vld [vmem:[%s1 + $0x98] sm:$0xff]
      %v393 = vld [vmem:[%s1 + $0xa0] sm:$0xff]
      %v394 = vld [vmem:[%s1 + $0xa8] sm:$0xff]
      %v395 = vld [vmem:[%s1 + $0xb0] sm:$0xff]
      %v396 = vld [vmem:[%s1 + $0xb8] sm:$0xff]
      %v397 = vld [vmem:[%s1 + $0xc0] sm:$0xff]
      %v398 = vld [vmem:[%s1 + $0xc8] sm:$0xff]
      %v399 = vld [vmem:[%s1 + $0xd0] sm:$0xff]
      %v400 = vld [vmem:[%s1 + $0xd8] sm:$0xff]
      %v401 = vld [vmem:[%s1 + $0xe0] sm:$0xff]
      %v402 = vld [vmem:[%s1 + $0xe8] sm:$0xff]
      %v403 = vld [vmem:[%s1 + $0xf0] sm:$0xff]
      %v404 = vld [vmem:[%s1 + $0xf8] sm:$0xff]
      %v405 = vld [vmem:[%s1 + $0x100] sm:$0xff]
      %v406 = vld [vmem:[%s1 + $0x108] sm:$0xff]
      %v407 = vld [vmem:[%s1 + $0x110] sm:$0xff]
      %v408 = vld [vmem:[%s1 + $0x118] sm:$0xff]
      %v409 = vld [vmem:[%s1 + $0x120] sm:$0xff]
      %v410 = vld [vmem:[%s1 + $0x128] sm:$0xff]
      %v411 = vld [vmem:[%s1 + $0x130] sm:$0xff]
      %v412 = vld [vmem:[%s1 + $0x138] sm:$0xff]
      %v413 = vld [vmem:[%s1 + $0x140] sm:$0xff]
      %v414 = vld [vmem:[%s1 + $0x148] sm:$0xff]
      %v415 = vld [vmem:[%s1 + $0x150] sm:$0xff]
      %v416 = vld [vmem:[%s1 + $0x158] sm:$0xff]
      %v417 = vld [vmem:[%s1 + $0x160] sm:$0xff]
      %v418 = vld [vmem:[%s1 + $0x168] sm:$0xff]
      %v419 = vld [vmem:[%s1 + $0x170] sm:$0xff]
      %v420 = vld [vmem:[%s1 + $0x178] sm:$0xff]
      %v421 = vld [vmem:[%s1 + $0x180] sm:$0xff]
      %v422 = vld [vmem:[%s1 + $0x188] sm:$0xff]
      %v423 = vld [vmem:[%s1 + $0x190] sm:$0xff]
      %v424 = vld [vmem:[%s1 + $0x198] sm:$0xff]
      %v425 = vld [vmem:[%s1 + $0x1a0] sm:$0xff]
      %v426 = vld [vmem:[%s1 + $0x1a8] sm:$0xff]
      %v427 = vld [vmem:[%s1 + $0x1b0] sm:$0xff]
      %v428 = vld [vmem:[%s1 + $0x1b8] sm:$0xff]
      %v429 = vld [vmem:[%s1 + $0x1c0] sm:$0xff]
      %v430 = vld [vmem:[%s1 + $0x1c8] sm:$0xff]
      %v431 = vld [vmem:[%s1 + $0x1d0] sm:$0xff]
      %v432 = vld [vmem:[%s1 + $0x1d8] sm:$0xff]
      %v433 = vld [vmem:[%s1 + $0x1e0] sm:$0xff]
      %v434 = vld [vmem:[%s1 + $0x1e8] sm:$0xff]
      %v435 = vld [vmem:[%s1 + $0x1f0] sm:$0xff]
      %v436 = vld [vmem:[%s1 + $0x1f8] sm:$0xff]
      %v437 = vld [vmem:[%s1 + $0x200] sm:$0xff]
      %v438 = vld [vmem:[%s1 + $0x208] sm:$0xff]
      %v439 = vld [vmem:[%s1 + $0x210] sm:$0xff]
      %v440 = vld [vmem:[%s1 + $0x218] sm:$0xff]
      %v441 = vld [vmem:[%s1 + $0x220] sm:$0xff]
      %v442 = vld [vmem:[%s1 + $0x228] sm:$0xff]
      %v443 = vld [vmem:[%s1 + $0x230] sm:$0xff]
      %v444 = vld [vmem:[%s1 + $0x238] sm:$0xff]
      %v445 = vld [vmem:[%s1 + $0x240] sm:$0xff]
      %v446 = vld [vmem:[%s1 + $0x248] sm:$0xff]
      %v447 = vld [vmem:[%s1 + $0x250] sm:$0xff]
      %v448 = vld [vmem:[%s1 + $0x258] sm:$0xff]
      %v449 = vld [vmem:[%s1 + $0x260] sm:$0xff]
      %v450 = vld [vmem:[%s1 + $0x268] sm:$0xff]
      %v451 = vld [vmem:[%s1 + $0x270] sm:$0xff]
      %v452 = vld [vmem:[%s1 + $0x278] sm:$0xff]
      %v453 = vld [vmem:[%s1 + $0x280] sm:$0xff]
      %v454 = vld [vmem:[%s1 + $0x288] sm:$0xff]
      %v455 = vld [vmem:[%s1 + $0x290] sm:$0xff]
      %v456 = vld [vmem:[%s1 + $0x298] sm:$0xff]
      %v457 = vld [vmem:[%s1 + $0x2a0] sm:$0xff]
      %v458 = vld [vmem:[%s1 + $0x2a8] sm:$0xff]
      %v459 = vld [vmem:[%s1 + $0x2b0] sm:$0xff]
      %v460 = vld [vmem:[%s1 + $0x2b8] sm:$0xff]
      %v461 = vld [vmem:[%s1 + $0x2c0] sm:$0xff]
      %v462 = vld [vmem:[%s1 + $0x2c8] sm:$0xff]
      %v463 = vld [vmem:[%s1 + $0x2d0] sm:$0xff]
      %v464 = vld [vmem:[%s1 + $0x2d8] sm:$0xff]
      %v465 = vld [vmem:[%s1 + $0x2e0] sm:$0xff]
      %v466 = vld [vmem:[%s1 + $0x2e8] sm:$0xff]
      %v467 = vld [vmem:[%s1 + $0x2f0] sm:$0xff]
      %v468 = vld [vmem:[%s1 + $0x2f8] sm:$0xff]
      %v469 = vld [vmem:[%s1 + $0x300] sm:$0xff]
      %v470 = vld [vmem:[%s1 + $0x308] sm:$0xff]
      %v471 = vld [vmem:[%s1 + $0x310] sm:$0xff]
      %v472 = vld [vmem:[%s1 + $0x318] sm:$0xff]
      %v473 = vld [vmem:[%s1 + $0x320] sm:$0xff]
      %v474 = vld [vmem:[%s1 + $0x328] sm:$0xff]
      %v475 = vld [vmem:[%s1 + $0x330] sm:$0xff]
      %v476 = vld [vmem:[%s1 + $0x338] sm:$0xff]
      %v477 = vld [vmem:[%s1 + $0x340] sm:$0xff]
      %v478 = vld [vmem:[%s1 + $0x348] sm:$0xff]
      %v479 = vld [vmem:[%s1 + $0x350] sm:$0xff]
      %v480 = vld [vmem:[%s1 + $0x358] sm:$0xff]
      %v481 = vld [vmem:[%s1 + $0x360] sm:$0xff]
      %v482 = vld [vmem:[%s1 + $0x368] sm:$0xff]
      %v483 = vld [vmem:[%s1 + $0x370] sm:$0xff]
      %v484 = vld [vmem:[%s1 + $0x378] sm:$0xff]
      %v485 = vld [vmem:[%s1 + $0x380] sm:$0xff]
      %v486 = vld [vmem:[%s1 + $0x388] sm:$0xff]
      %v487 = vld [vmem:[%s1 + $0x390] sm:$0xff]
      %v488 = vld [vmem:[%s1 + $0x398] sm:$0xff]
      %v489 = vld [vmem:[%s1 + $0x3a0] sm:$0xff]
      %v490 = vld [vmem:[%s1 + $0x3a8] sm:$0xff]
      %v491 = vld [vmem:[%s1 + $0x3b0] sm:$0xff]
      %v492 = vld [vmem:[%s1 + $0x3b8] sm:$0xff]
      %v493 = vld [vmem:[%s1 + $0x3c0] sm:$0xff]
      %v494 = vld [vmem:[%s1 + $0x3c8] sm:$0xff]
      %v495 = vld [vmem:[%s1 + $0x3d0] sm:$0xff]
      %v496 = vld [vmem:[%s1 + $0x3d8] sm:$0xff]
      %v497 = vld [vmem:[%s1 + $0x3e0] sm:$0xff]
      %v498 = vld [vmem:[%s1 + $0x3e8] sm:$0xff]
      %v499 = vld [vmem:[%s1 + $0x3f0] sm:$0xff]
      %v500 = vld [vmem:[%s1 + $0x3f8] sm:$0xff]
      %v501 = vld [vmem:[%s2] sm:$0x1]
      %v503 = vlaneseq
      %v504 = vshrl.u32 %v503, 7
      %v505 = vsub.s32 0, %v504
      %v506 = vrot.slane %v501, %v505
      %v512 = vcombine.high %v369, %v369
      %v513 = vcombine.high %v370, %v370
      %v514 = vcombine.high %v371, %v371
      %v515 = vcombine.high %v372, %v372
      %520 = vmatprep.subr.mxu0 0.0
      %521 = vmatpush1.msra.mxu0 %v373
      %522 = vmatprep.subr.mxu0 0.0
      %523 = vmatpush1.msra.mxu0 %v374
      %524 = vmatprep.subr.mxu0 0.0
      %525 = vmatpush1.msra.mxu0 %v375
      %526 = vmatprep.subr.mxu0 0.0
      %527 = vmatpush1.msra.mxu0 %v376
      %528 = vmatprep.subr.mxu0 0.0
      %529 = vmatpush1.msra.mxu0 %v377
      %530 = vmatprep.subr.mxu0 0.0
      %531 = vmatpush1.msra.mxu0 %v378
      %532 = vmatprep.subr.mxu0 0.0
      %533 = vmatpush1.msra.mxu0 %v379
      %534 = vmatprep.subr.mxu0 0.0
      %535 = vmatpush1.msra.mxu0 %v380
      %536 = vmatprep.subr.mxu0 0.0
      %537 = vmatpush1.msra.mxu0 %v381
      %538 = vmatprep.subr.mxu0 0.0
      %539 = vmatpush1.msra.mxu0 %v382
      %540 = vmatprep.subr.mxu0 0.0
      %541 = vmatpush1.msra.mxu0 %v383
      %542 = vmatprep.subr.mxu0 0.0
      %543 = vmatpush1.msra.mxu0 %v384
      %544 = vmatprep.subr.mxu0 0.0
      %545 = vmatpush1.msra.mxu0 %v385
      %546 = vmatprep.subr.mxu0 0.0
      %547 = vmatpush1.msra.mxu0 %v386
      %548 = vmatprep.subr.mxu0 0.0
      %549 = vmatpush1.msra.mxu0 %v387
      %550 = vmatprep.subr.mxu0 0.0
      %551 = vmatpush1.msra.mxu0 %v388
      %552 = vmatprep.subr.mxu0 0.0
      %553 = vmatpush1.msra.mxu0 %v389
      %554 = vmatprep.subr.mxu0 0.0
      %555 = vmatpush1.msra.mxu0 %v390
      %556 = vmatprep.subr.mxu0 0.0
      %557 = vmatpush1.msra.mxu0 %v391
      %558 = vmatprep.subr.mxu0 0.0
      %559 = vmatpush1.msra.mxu0 %v392
      %560 = vmatprep.subr.mxu0 0.0
      %561 = vmatpush1.msra.mxu0 %v393
      %562 = vmatprep.subr.mxu0 0.0
      %563 = vmatpush1.msra.mxu0 %v394
      %564 = vmatprep.subr.mxu0 0.0
      %565 = vmatpush1.msra.mxu0 %v395
      %566 = vmatprep.subr.mxu0 0.0
      %567 = vmatpush1.msra.mxu0 %v396
      %568 = vmatprep.subr.mxu0 0.0
      %569 = vmatpush1.msra.mxu0 %v397
      %570 = vmatprep.subr.mxu0 0.0
      %571 = vmatpush1.msra.mxu0 %v398
      %572 = vmatprep.subr.mxu0 0.0
      %573 = vmatpush1.msra.mxu0 %v399
      %574 = vmatprep.subr.mxu0 0.0
      %575 = vmatpush1.msra.mxu0 %v400
      %576 = vmatprep.subr.mxu0 0.0
      %577 = vmatpush1.msra.mxu0 %v401
      %578 = vmatprep.subr.mxu0 0.0
      %579 = vmatpush1.msra.mxu0 %v402
      %580 = vmatprep.subr.mxu0 0.0
      %581 = vmatpush1.msra.mxu0 %v403
      %582 = vmatprep.subr.mxu0 0.0
      %583 = vmatpush1.msra.mxu0 %v404
      %584 = vmatprep.mubr.f32.mxu0 %v512
      %585 = vmatmul.mubr.f32.gmra.mrb[0].mxu0 %v369
      %v586 = vpop.f32.mrb[0].mxu0
      %v587 = vadd.f32 %v506, %v586
      %v588 = vpop.f32.mrb[0].mxu0
      %589 = vdwg.mxu0
      %590 = vmatprep.subr.mxu0 0.0
      %591 = vmatpush1.msra.mxu0 %v405
      %592 = vmatprep.subr.mxu0 0.0
      %593 = vmatpush1.msra.mxu0 %v406
      %594 = vmatprep.subr.mxu0 0.0
      %595 = vmatpush1.msra.mxu0 %v407
      %596 = vmatprep.subr.mxu0 0.0
      %597 = vmatpush1.msra.mxu0 %v408
      %598 = vmatprep.subr.mxu0 0.0
      %599 = vmatpush1.msra.mxu0 %v409
      %600 = vmatprep.subr.mxu0 0.0
      %601 = vmatpush1.msra.mxu0 %v410
      %602 = vmatprep.subr.mxu0 0.0
      %603 = vmatpush1.msra.mxu0 %v411
      %604 = vmatprep.subr.mxu0 0.0
      %605 = vmatpush1.msra.mxu0 %v412
      %606 = vmatprep.subr.mxu0 0.0
      %607 = vmatpush1.msra.mxu0 %v413
      %608 = vmatprep.subr.mxu0 0.0
      %609 = vmatpush1.msra.mxu0 %v414
      %610 = vmatprep.subr.mxu0 0.0
      %611 = vmatpush1.msra.mxu0 %v415
      %612 = vmatprep.subr.mxu0 0.0
      %613 = vmatpush1.msra.mxu0 %v416
      %614 = vmatprep.subr.mxu0 0.0
      %615 = vmatpush1.msra.mxu0 %v417
      %616 = vmatprep.subr.mxu0 0.0
      %617 = vmatpush1.msra.mxu0 %v418
      %618 = vmatprep.subr.mxu0 0.0
      %619 = vmatpush1.msra.mxu0 %v419
      %620 = vmatprep.subr.mxu0 0.0
      %621 = vmatpush1.msra.mxu0 %v420
      %622 = vmatprep.subr.mxu0 0.0
      %623 = vmatpush1.msra.mxu0 %v421
      %624 = vmatprep.subr.mxu0 0.0
      %625 = vmatpush1.msra.mxu0 %v422
      %626 = vmatprep.subr.mxu0 0.0
      %627 = vmatpush1.msra.mxu0 %v423
      %628 = vmatprep.subr.mxu0 0.0
      %629 = vmatpush1.msra.mxu0 %v424
      %630 = vmatprep.subr.mxu0 0.0
      %631 = vmatpush1.msra.mxu0 %v425
      %632 = vmatprep.subr.mxu0 0.0
      %633 = vmatpush1.msra.mxu0 %v426
      %634 = vmatprep.subr.mxu0 0.0
      %635 = vmatpush1.msra.mxu0 %v427
      %636 = vmatprep.subr.mxu0 0.0
      %637 = vmatpush1.msra.mxu0 %v428
      %638 = vmatprep.subr.mxu0 0.0
      %639 = vmatpush1.msra.mxu0 %v429
      %640 = vmatprep.subr.mxu0 0.0
      %641 = vmatpush1.msra.mxu0 %v430
      %642 = vmatprep.subr.mxu0 0.0
      %643 = vmatpush1.msra.mxu0 %v431
      %644 = vmatprep.subr.mxu0 0.0
      %645 = vmatpush1.msra.mxu0 %v432
      %646 = vmatprep.subr.mxu0 0.0
      %647 = vmatpush1.msra.mxu0 %v433
      %648 = vmatprep.subr.mxu0 0.0
      %649 = vmatpush1.msra.mxu0 %v434
      %650 = vmatprep.subr.mxu0 0.0
      %651 = vmatpush1.msra.mxu0 %v435
      %652 = vmatprep.subr.mxu0 0.0
      %653 = vmatpush1.msra.mxu0 %v436
      %654 = vmatprep.mubr.f32.mxu0 %v513
      %655 = vmatmul.mubr.f32.gmra.mrb[0].mxu0 %v370
      %v656 = vpop.f32.mrb[0].mxu0
      %v657 = vadd.f32 %v587, %v656
      %v658 = vpop.f32.mrb[0].mxu0
      %659 = vdwg.mxu0
      %660 = vmatprep.subr.mxu0 0.0
      %661 = vmatpush1.msra.mxu0 %v437
      %662 = vmatprep.subr.mxu0 0.0
      %663 = vmatpush1.msra.mxu0 %v438
      %664 = vmatprep.subr.mxu0 0.0
      %665 = vmatpush1.msra.mxu0 %v439
      %666 = vmatprep.subr.mxu0 0.0
      %667 = vmatpush1.msra.mxu0 %v440
      %668 = vmatprep.subr.mxu0 0.0
      %669 = vmatpush1.msra.mxu0 %v441
      %670 = vmatprep.subr.mxu0 0.0
      %671 = vmatpush1.msra.mxu0 %v442
      %672 = vmatprep.subr.mxu0 0.0
      %673 = vmatpush1.msra.mxu0 %v443
      %674 = vmatprep.subr.mxu0 0.0
      %675 = vmatpush1.msra.mxu0 %v444
      %676 = vmatprep.subr.mxu0 0.0
      %677 = vmatpush1.msra.mxu0 %v445
      %678 = vmatprep.subr.mxu0 0.0
      %679 = vmatpush1.msra.mxu0 %v446
      %680 = vmatprep.subr.mxu0 0.0
      %681 = vmatpush1.msra.mxu0 %v447
      %682 = vmatprep.subr.mxu0 0.0
      %683 = vmatpush1.msra.mxu0 %v448
      %684 = vmatprep.subr.mxu0 0.0
      %685 = vmatpush1.msra.mxu0 %v449
      %686 = vmatprep.subr.mxu0 0.0
      %687 = vmatpush1.msra.mxu0 %v450
      %688 = vmatprep.subr.mxu0 0.0
      %689 = vmatpush1.msra.mxu0 %v451
      %690 = vmatprep.subr.mxu0 0.0
      %691 = vmatpush1.msra.mxu0 %v452
      %692 = vmatprep.subr.mxu0 0.0
      %693 = vmatpush1.msra.mxu0 %v453
      %694 = vmatprep.subr.mxu0 0.0
      %695 = vmatpush1.msra.mxu0 %v454
      %696 = vmatprep.subr.mxu0 0.0
      %697 = vmatpush1.msra.mxu0 %v455
      %698 = vmatprep.subr.mxu0 0.0
      %699 = vmatpush1.msra.mxu0 %v456
      %700 = vmatprep.subr.mxu0 0.0
      %701 = vmatpush1.msra.mxu0 %v457
      %702 = vmatprep.subr.mxu0 0.0
      %703 = vmatpush1.msra.mxu0 %v458
      %704 = vmatprep.subr.mxu0 0.0
      %705 = vmatpush1.msra.mxu0 %v459
      %706 = vmatprep.subr.mxu0 0.0
      %707 = vmatpush1.msra.mxu0 %v460
      %708 = vmatprep.subr.mxu0 0.0
      %709 = vmatpush1.msra.mxu0 %v461
      %710 = vmatprep.subr.mxu0 0.0
      %711 = vmatpush1.msra.mxu0 %v462
      %712 = vmatprep.subr.mxu0 0.0
      %713 = vmatpush1.msra.mxu0 %v463
      %714 = vmatprep.subr.mxu0 0.0
      %715 = vmatpush1.msra.mxu0 %v464
      %716 = vmatprep.subr.mxu0 0.0
      %717 = vmatpush1.msra.mxu0 %v465
      %718 = vmatprep.subr.mxu0 0.0
      %719 = vmatpush1.msra.mxu0 %v466
      %720 = vmatprep.subr.mxu0 0.0
      %721 = vmatpush1.msra.mxu0 %v467
      %722 = vmatprep.subr.mxu0 0.0
      %723 = vmatpush1.msra.mxu0 %v468
      %724 = vmatprep.mubr.f32.mxu0 %v514
      %725 = vmatmul.mubr.f32.gmra.mrb[0].mxu0 %v371
      %v726 = vpop.f32.mrb[0].mxu0
      %v727 = vadd.f32 %v657, %v726
      %v728 = vpop.f32.mrb[0].mxu0
      %729 = vdwg.mxu0
      %730 = vmatprep.subr.mxu0 0.0
      %731 = vmatpush1.msra.mxu0 %v469
      %732 = vmatprep.subr.mxu0 0.0
      %733 = vmatpush1.msra.mxu0 %v470
      %734 = vmatprep.subr.mxu0 0.0
      %735 = vmatpush1.msra.mxu0 %v471
      %736 = vmatprep.subr.mxu0 0.0
      %737 = vmatpush1.msra.mxu0 %v472
      %738 = vmatprep.subr.mxu0 0.0
      %739 = vmatpush1.msra.mxu0 %v473
      %740 = vmatprep.subr.mxu0 0.0
      %741 = vmatpush1.msra.mxu0 %v474
      %742 = vmatprep.subr.mxu0 0.0
      %743 = vmatpush1.msra.mxu0 %v475
      %744 = vmatprep.subr.mxu0 0.0
      %745 = vmatpush1.msra.mxu0 %v476
      %746 = vmatprep.subr.mxu0 0.0
      %747 = vmatpush1.msra.mxu0 %v477
      %748 = vmatprep.subr.mxu0 0.0
      %749 = vmatpush1.msra.mxu0 %v478
      %750 = vmatprep.subr.mxu0 0.0
      %751 = vmatpush1.msra.mxu0 %v479
      %752 = vmatprep.subr.mxu0 0.0
      %753 = vmatpush1.msra.mxu0 %v480
      %754 = vmatprep.subr.mxu0 0.0
      %755 = vmatpush1.msra.mxu0 %v481
      %756 = vmatprep.subr.mxu0 0.0
      %757 = vmatpush1.msra.mxu0 %v482
      %758 = vmatprep.subr.mxu0 0.0
      %759 = vmatpush1.msra.mxu0 %v483
      %760 = vmatprep.subr.mxu0 0.0
      %761 = vmatpush1.msra.mxu0 %v484
      %762 = vmatprep.subr.mxu0 0.0
      %763 = vmatpush1.msra.mxu0 %v485
      %764 = vmatprep.subr.mxu0 0.0
      %765 = vmatpush1.msra.mxu0 %v486
      %766 = vmatprep.subr.mxu0 0.0
      %767 = vmatpush1.msra.mxu0 %v487
      %768 = vmatprep.subr.mxu0 0.0
      %769 = vmatpush1.msra.mxu0 %v488
      %770 = vmatprep.subr.mxu0 0.0
      %771 = vmatpush1.msra.mxu0 %v489
      %772 = vmatprep.subr.mxu0 0.0
      %773 = vmatpush1.msra.mxu0 %v490
      %774 = vmatprep.subr.mxu0 0.0
      %775 = vmatpush1.msra.mxu0 %v491
      %776 = vmatprep.subr.mxu0 0.0
      %777 = vmatpush1.msra.mxu0 %v492
      %778 = vmatprep.subr.mxu0 0.0
      %779 = vmatpush1.msra.mxu0 %v493
      %780 = vmatprep.subr.mxu0 0.0
      %781 = vmatpush1.msra.mxu0 %v494
      %782 = vmatprep.subr.mxu0 0.0
      %783 = vmatpush1.msra.mxu0 %v495
      %784 = vmatprep.subr.mxu0 0.0
      %785 = vmatpush1.msra.mxu0 %v496
      %786 = vmatprep.subr.mxu0 0.0
      %787 = vmatpush1.msra.mxu0 %v497
      %788 = vmatprep.subr.mxu0 0.0
      %789 = vmatpush1.msra.mxu0 %v498
      %790 = vmatprep.subr.mxu0 0.0
      %791 = vmatpush1.msra.mxu0 %v499
      %792 = vmatprep.subr.mxu0 0.0
      %793 = vmatpush1.msra.mxu0 %v500
      %794 = vmatprep.mubr.f32.mxu0 %v515
      %795 = vmatmul.mubr.f32.gmra.mrb[0].mxu0 %v372
      %v796 = vpop.f32.mrb[0].mxu0
      %v797 = vadd.f32 %v727, %v796
      %v798 = vpop.f32.mrb[0].mxu0
      %799 = vdwg.mxu0
      %v800 = vld [vmem:[%s3] sm:$0xff]
      %v801 = vld [vmem:[%s3 + $0x8] sm:$0xff]
      %v802 = vld [vmem:[%s3 + $0x10] sm:$0xff]
      %v803 = vld [vmem:[%s3 + $0x18] sm:$0xff]
      %vm804 = vcmask 261120
      %v806 = vsel %vm804, %v797, 0
      %808 = vmatprep.subr.mxu0 0.0
      %809 = vmatpush1.msra.mxu0 %v800
      %810 = vmatprep.subr.mxu0 0.0
      %811 = vmatpush1.msra.mxu0 %v801
      %812 = vmatprep.subr.mxu0 0.0
      %813 = vmatpush1.msra.mxu0 %v802
      %814 = vmatprep.subr.mxu0 0.0
      %815 = vmatpush1.msra.mxu0 %v803
      %816 = vmatprep.subr.mxu0 0.0
      %817 = vmatpush1.msra.mxu0 0.0
      %818 = vmatprep.subr.mxu0 0.0
      %819 = vmatpush1.msra.mxu0 0.0
      %820 = vmatprep.subr.mxu0 0.0
      %821 = vmatpush1.msra.mxu0 0.0
      %822 = vmatprep.subr.mxu0 0.0
      %823 = vmatpush1.msra.mxu0 0.0
      %824 = vmatprep.subr.mxu0 0.0
      %825 = vmatpush1.msra.mxu0 0.0
      %826 = vmatprep.subr.mxu0 0.0
      %827 = vmatpush1.msra.mxu0 0.0
      %828 = vmatprep.subr.mxu0 0.0
      %829 = vmatpush1.msra.mxu0 0.0
      %830 = vmatprep.subr.mxu0 0.0
      %831 = vmatpush1.msra.mxu0 0.0
      %832 = vmatprep.subr.mxu0 0.0
      %833 = vmatpush1.msra.mxu0 0.0
      %834 = vmatprep.subr.mxu0 0.0
      %835 = vmatpush1.msra.mxu0 0.0
      %836 = vmatprep.subr.mxu0 0.0
      %837 = vmatpush1.msra.mxu0 0.0
      %838 = vmatprep.subr.mxu0 0.0
      %839 = vmatpush1.msra.mxu0 0.0
      %840 = vmatprep.subr.mxu0 0.0
      %841 = vmatpush1.msra.mxu0 0.0
      %842 = vmatprep.subr.mxu0 0.0
      %843 = vmatpush1.msra.mxu0 0.0
      %844 = vmatprep.subr.mxu0 0.0
      %845 = vmatpush1.msra.mxu0 0.0
      %846 = vmatprep.subr.mxu0 0.0
      %847 = vmatpush1.msra.mxu0 0.0
      %848 = vmatprep.subr.mxu0 0.0
      %849 = vmatpush1.msra.mxu0 0.0
      %850 = vmatprep.subr.mxu0 0.0
      %851 = vmatpush1.msra.mxu0 0.0
      %852 = vmatprep.subr.mxu0 0.0
      %853 = vmatpush1.msra.mxu0 0.0
      %854 = vmatprep.subr.mxu0 0.0
      %855 = vmatpush1.msra.mxu0 0.0
      %856 = vmatprep.subr.mxu0 0.0
      %857 = vmatpush1.msra.mxu0 0.0
      %858 = vmatprep.subr.mxu0 0.0
      %859 = vmatpush1.msra.mxu0 0.0
      %860 = vmatprep.subr.mxu0 0.0
      %861 = vmatpush1.msra.mxu0 0.0
      %862 = vmatprep.subr.mxu0 0.0
      %863 = vmatpush1.msra.mxu0 0.0
      %864 = vmatprep.subr.mxu0 0.0
      %865 = vmatpush1.msra.mxu0 0.0
      %866 = vmatprep.subr.mxu0 0.0
      %867 = vmatpush1.msra.mxu0 0.0
      %868 = vmatprep.subr.mxu0 0.0
      %869 = vmatpush1.msra.mxu0 0.0
      %870 = vmatprep.subr.mxu0 0.0
      %871 = vmatpush1.msra.mxu0 0.0
      %872 = vmatprep.mubr.f32.mxu0 0.0
      %873 = vmatmul.mubr.f32.gmra.mrb[0].mxu0 %v806
      %v874 = vpop.f32.mrb[0].mxu0
      %v875 = vadd.f32 0.0, %v874
      %v876 = vpop.f32.mrb[0].mxu0
      %877 = vdwg.mxu0
      %v878 = vtanh.pop %v875
      %v879 = vld [vmem:[%s4] sm:$0x1]
      %v881 = vlaneseq
      %v882 = vshrl.u32 %v881, 7
      %v883 = vsub.s32 0, %v882
      %v884 = vrot.slane %v879, %v883
      %v886 = vmul.f32 %v878, %v884
      %vm887 = vcmask 125952
      %v888 = vsel %vm887, %v886, 0.0
      %889 = vadd.xlane.f32.xlu0 %v888
      %v890 = vpop.xlane.xlu0 %889
      %vm891 = vcmask 1043456
      %v892 = vsel %vm891, %v890, -inf
      %v893 = vrot.slane %v892, 4
      %v894 = vmax.f32 %v892, %v893
      %v895 = vrot.slane %v894, 2
      %v896 = vmax.f32 %v894, %v895
      %v897 = vrot.slane %v896, 1
      %v898 = vmax.f32 %v896, %v897
      %v899 = vsub.f32 %v890, %v898
      %v900 = vmul.f32 %v899, 1.442695
      %v901 = vpow.pop %v900
      %v902 = vsel %vm891, %v901, 0.0
      %v903 = vrot.slane %v902, 4
      %v904 = vadd.f32 %v902, %v903
      %v905 = vrot.slane %v904, 2
      %v906 = vadd.f32 %v904, %v905
      %v907 = vrot.slane %v906, 1
      %v908 = vadd.f32 %v906, %v907
      %v909 = vrcp.pop %v908
      %v910 = vmul.f32 %v901, %v909
      %v911 = vmul.f32 %v910, %v797
      %vm912 = vcmask 257024
      %v913 = vsel %vm912, %v911, 0.0
      %v914 = vrot.slane %v913, 4
      %v915 = vadd.f32 %v913, %v914
      %v916 = vrot.slane %v915, 2
      %v917 = vadd.f32 %v915, %v916
      %v918 = vrot.slane %v917, 1
      %v919 = vadd.f32 %v917, %v918
      %v920 = vmul.f32 %v919, 0.25
      %v921 = vld [vmem:[%s5] sm:$0xff]
      %v922 = vld [vmem:[%s5 + $0x8] sm:$0xff]
      %v923 = vld [vmem:[%s5 + $0x10] sm:$0xff]
      %v924 = vld [vmem:[%s5 + $0x18] sm:$0xff]
      %v925 = vld [vmem:[%s6] sm:$0x1]
      %v927 = vsel %vm804, %v920, 0
      %929 = vmatprep.subr.mxu0 0.0
      %930 = vmatpush1.msra.mxu0 %v921
      %931 = vmatprep.subr.mxu0 0.0
      %932 = vmatpush1.msra.mxu0 %v922
      %933 = vmatprep.subr.mxu0 0.0
      %934 = vmatpush1.msra.mxu0 %v923
      %935 = vmatprep.subr.mxu0 0.0
      %936 = vmatpush1.msra.mxu0 %v924
      %937 = vmatprep.subr.mxu0 0.0
      %938 = vmatpush1.msra.mxu0 0.0
      %939 = vmatprep.subr.mxu0 0.0
      %940 = vmatpush1.msra.mxu0 0.0
      %941 = vmatprep.subr.mxu0 0.0
      %942 = vmatpush1.msra.mxu0 0.0
      %943 = vmatprep.subr.mxu0 0.0
      %944 = vmatpush1.msra.mxu0 0.0
      %945 = vmatprep.subr.mxu0 0.0
      %946 = vmatpush1.msra.mxu0 0.0
      %947 = vmatprep.subr.mxu0 0.0
      %948 = vmatpush1.msra.mxu0 0.0
      %949 = vmatprep.subr.mxu0 0.0
      %950 = vmatpush1.msra.mxu0 0.0
      %951 = vmatprep.subr.mxu0 0.0
      %952 = vmatpush1.msra.mxu0 0.0
      %953 = vmatprep.subr.mxu0 0.0
      %954 = vmatpush1.msra.mxu0 0.0
      %955 = vmatprep.subr.mxu0 0.0
      %956 = vmatpush1.msra.mxu0 0.0
      %957 = vmatprep.subr.mxu0 0.0
      %958 = vmatpush1.msra.mxu0 0.0
      %959 = vmatprep.subr.mxu0 0.0
      %960 = vmatpush1.msra.mxu0 0.0
      %961 = vmatprep.subr.mxu0 0.0
      %962 = vmatpush1.msra.mxu0 0.0
      %963 = vmatprep.subr.mxu0 0.0
      %964 = vmatpush1.msra.mxu0 0.0
      %965 = vmatprep.subr.mxu0 0.0
      %966 = vmatpush1.msra.mxu0 0.0
      %967 = vmatprep.subr.mxu0 0.0
      %968 = vmatpush1.msra.mxu0 0.0
      %969 = vmatprep.subr.mxu0 0.0
      %970 = vmatpush1.msra.mxu0 0.0
      %971 = vmatprep.subr.mxu0 0.0
      %972 = vmatpush1.msra.mxu0 0.0
      %973 = vmatprep.subr.mxu0 0.0
      %974 = vmatpush1.msra.mxu0 0.0
      %975 = vmatprep.subr.mxu0 0.0
      %976 = vmatpush1.msra.mxu0 0.0
      %977 = vmatprep.subr.mxu0 0.0
      %978 = vmatpush1.msra.mxu0 0.0
      %979 = vmatprep.subr.mxu0 0.0
      %980 = vmatpush1.msra.mxu0 0.0
      %981 = vmatprep.subr.mxu0 0.0
      %982 = vmatpush1.msra.mxu0 0.0
      %983 = vmatprep.subr.mxu0 0.0
      %984 = vmatpush1.msra.mxu0 0.0
      %985 = vmatprep.subr.mxu0 0.0
      %986 = vmatpush1.msra.mxu0 0.0
      %987 = vmatprep.subr.mxu0 0.0
      %988 = vmatpush1.msra.mxu0 0.0
      %989 = vmatprep.subr.mxu0 0.0
      %990 = vmatpush1.msra.mxu0 0.0
      %991 = vmatprep.subr.mxu0 0.0
      %992 = vmatpush1.msra.mxu0 0.0
      %993 = vmatprep.mubr.f32.mxu0 0.0
      %994 = vmatmul.mubr.f32.gmra.mrb[0].mxu0 %v927
      %v995 = vpop.f32.mrb[0].mxu0
      %v996 = vadd.f32 %v925, %v995
      %v997 = vpop.f32.mrb[0].mxu0
      %998 = vdwg.mxu0
      %v999 = vld [vmem:[%s7] sm:$0xff]
      %v1000 = vld [vmem:[%s7 + $0x8] sm:$0xff]
      %v1001 = vld [vmem:[#allocation2] sm:$0x1]
      %vm1002 = vcmask 130048
      %v1004 = vsel %vm1002, %v996, 0
      %1006 = vmatprep.subr.mxu0 0.0
      %1007 = vmatpush1.msra.mxu0 %v999
      %1008 = vmatprep.subr.mxu0 0.0
      %1009 = vmatpush1.msra.mxu0 %v1000
      %1010 = vmatprep.subr.mxu0 0.0
      %1011 = vmatpush1.msra.mxu0 0.0
      %1012 = vmatprep.subr.mxu0 0.0
      %1013 = vmatpush1.msra.mxu0 0.0
      %1014 = vmatprep.subr.mxu0 0.0
      %1015 = vmatpush1.msra.mxu0 0.0
      %1016 = vmatprep.subr.mxu0 0.0
      %1017 = vmatpush1.msra.mxu0 0.0
      %1018 = vmatprep.subr.mxu0 0.0
      %1019 = vmatpush1.msra.mxu0 0.0
      %1020 = vmatprep.subr.mxu0 0.0
      %1021 = vmatpush1.msra.mxu0 0.0
      %1022 = vmatprep.subr.mxu0 0.0
      %1023 = vmatpush1.msra.mxu0 0.0
      %1024 = vmatprep.subr.mxu0 0.0
      %1025 = vmatpush1.msra.mxu0 0.0
      %1026 = vmatprep.subr.mxu0 0.0
      %1027 = vmatpush1.msra.mxu0 0.0
      %1028 = vmatprep.subr.mxu0 0.0
      %1029 = vmatpush1.msra.mxu0 0.0
      %1030 = vmatprep.subr.mxu0 0.0
      %1031 = vmatpush1.msra.mxu0 0.0
      %1032 = vmatprep.subr.mxu0 0.0
      %1033 = vmatpush1.msra.mxu0 0.0
      %1034 = vmatprep.subr.mxu0 0.0
      %1035 = vmatpush1.msra.mxu0 0.0
      %1036 = vmatprep.subr.mxu0 0.0
      %1037 = vmatpush1.msra.mxu0 0.0
      %1038 = vmatprep.subr.mxu0 0.0
      %1039 = vmatpush1.msra.mxu0 0.0
      %1040 = vmatprep.subr.mxu0 0.0
      %1041 = vmatpush1.msra.mxu0 0.0
      %1042 = vmatprep.subr.mxu0 0.0
      %1043 = vmatpush1.msra.mxu0 0.0
      %1044 = vmatprep.subr.mxu0 0.0
      %1045 = vmatpush1.msra.mxu0 0.0
      %1046 = vmatprep.subr.mxu0 0.0
      %1047 = vmatpush1.msra.mxu0 0.0
      %1048 = vmatprep.subr.mxu0 0.0
      %1049 = vmatpush1.msra.mxu0 0.0
      %1050 = vmatprep.subr.mxu0 0.0
      %1051 = vmatpush1.msra.mxu0 0.0
      %1052 = vmatprep.subr.mxu0 0.0
      %1053 = vmatpush1.msra.mxu0 0.0
      %1054 = vmatprep.subr.mxu0 0.0
      %1055 = vmatpush1.msra.mxu0 0.0
      %1056 = vmatprep.subr.mxu0 0.0
      %1057 = vmatpush1.msra.mxu0 0.0
      %1058 = vmatprep.subr.mxu0 0.0
      %1059 = vmatpush1.msra.mxu0 0.0
      %1060 = vmatprep.subr.mxu0 0.0
      %1061 = vmatpush1.msra.mxu0 0.0
      %1062 = vmatprep.subr.mxu0 0.0
      %1063 = vmatpush1.msra.mxu0 0.0
      %1064 = vmatprep.subr.mxu0 0.0
      %1065 = vmatpush1.msra.mxu0 0.0
      %1066 = vmatprep.subr.mxu0 0.0
      %1067 = vmatpush1.msra.mxu0 0.0
      %1068 = vmatprep.subr.mxu0 0.0
      %1069 = vmatpush1.msra.mxu0 0.0
      %1070 = vmatprep.mubr.f32.mxu0 0.0
      %1071 = vmatmul.mubr.f32.gmra.mrb[0].mxu0 %v1004
      %v1072 = vpop.f32.mrb[0].mxu0
      %v1073 = vadd.f32 %v1001, %v1072
      %v1074 = vpop.f32.mrb[0].mxu0
      %1075 = vdwg.mxu0
      %vm1076 = vcmask 0
      %1077 = vst.msk [vmem:[%s364] sm:$0x1] %vm1076, %v1073
      %vm1078 = vcmask 3072
      %1079 = vst.msk [vmem:[%s368] sm:$0xf] %vm1078, %v910
      %p1080 = scmp.lt.s32.totalorder %s24, 1
      %s1081 = scalar_select %p1080, %s24, 1
      %s1082 = scalar_lea.vmem %s9, %s1081
      %p1083 = scmp.lt.s32.totalorder %s24, 1
      %s1084 = scalar_select %p1083, %s24, 1
      %s1085 = smul.addr %s1084, 4
      %s1086 = scalar_lea.vmem %s10, %s1085
      // Predicated region
      $region57: #{tpu_custom_call.1} parent=55 // pred_check
        %p1087 = pneg %p236
      $region58: #{tpu_custom_call.1} parent=55 // pred_check_branch
        %1089 = sbr.rel (%p1087) target = $region60
      $region59: #{tpu_custom_call.1} parent=55 // pred_region
        _
      $region60: #{tpu_custom_call.1} parent=55 // pred_fallthru
        _
      // Predicated region
      $region61: #{tpu_custom_call.1} parent=55 // pred_check
        %p1090 = pneg %p262
      $region62: #{tpu_custom_call.1} parent=55 // pred_check_branch
        %1092 = sbr.rel (%p1090) target = $region64
      $region63: #{tpu_custom_call.1} parent=55 // pred_region
        _
      $region64: #{tpu_custom_call.1} parent=55 // pred_fallthru
        _
    $region56: #{tpu_custom_call.1} parent=5 // pred_fallthru
      _
    %p1093 = scmp.le.s32.totalorder 2, %s19
    // Predicated region
    $region65: #{tpu_custom_call.1} parent=5 // pred_check
      %p1094 = pneg %p1093
    $region66: #{tpu_custom_call.1} parent=5 // pred_check_branch
      %1096 = sbr.rel (%p1094) target = $region68
    $region67: #{tpu_custom_call.1} parent=5 // pred_region
      %s1097 = ssub.s32 %s19, 2
      // Predicated region
      $region69: #{tpu_custom_call.1} parent=67 // pred_check
        %p1098 = pneg %p242
      $region70: #{tpu_custom_call.1} parent=67 // pred_check_branch
        %1100 = sbr.rel (%p1098) target = $region72
      $region71: #{tpu_custom_call.1} parent=67 // pred_region
        %p1101 = scmp.lt.s32.totalorder %s25, 1
        %s1102 = scalar_select %p1101, %s25, 1
        %s1103 = scalar_lea.vmem %s9, %s1102
      $region72: #{tpu_custom_call.1} parent=67 // pred_fallthru
        _
      // Predicated region
      $region73: #{tpu_custom_call.1} parent=67 // pred_check
        %p1104 = pneg %p268
      $region74: #{tpu_custom_call.1} parent=67 // pred_check_branch
        %1106 = sbr.rel (%p1104) target = $region76
      $region75: #{tpu_custom_call.1} parent=67 // pred_region
        %p1107 = scmp.lt.s32.totalorder %s25, 1
        %s1108 = scalar_select %p1107, %s25, 1
        %s1109 = smul.addr %s1108, 4
        %s1110 = scalar_lea.vmem %s10, %s1109
      $region76: #{tpu_custom_call.1} parent=67 // pred_fallthru
        _
    $region68: #{tpu_custom_call.1} parent=5 // pred_fallthru
      _
  $region6: #{tpu_custom_call.1} parent=0 // loop_footer
    %s23 = sadd.s32 1, %s19
  $region7: #{tpu_custom_call.1} parent=0 // loop_footer_branch
    %18 = sbr.rel target = $region3
  $region8: #{tpu_custom_call.1} parent=0 // loop_exit
    _

</llo_original>
